<compile_context>
chip_gen: v5e
topology: v5e:2x2
jax: 0.10.0
libtpu: 0.0.40
codegen_flags: <defaults>
</compile_context>

<pallas_src>
import functools

import jax
import jax.numpy as jnp
from jax.experimental import pallas as pl
from jax.experimental.pallas import tpu as pltpu


def _shift_cols(load_fn, d, rows, hw):
    """Return y with y[:, p] = src[:, p + d], zero-filled where p + d is outside [0, hw)."""
    if d == 0:
        return load_fn(0, hw)
    if d > 0:
        body = load_fn(d, hw - d)
        return jnp.concatenate([body, jnp.zeros((rows, d), jnp.float32)], axis=1)
    body = load_fn(0, hw + d)
    return jnp.concatenate([jnp.zeros((rows, -d), jnp.float32), body], axis=1)


def triple_pass_kernel(x_ref, wb_ref, wc_ref, out_ref, cat_ref, *, W):
    # x_ref:   (1, C, HW)       input image, spatial dims flattened (HW on lanes)
    # wb_ref:  (3C, 25C + 1)    combined 1x1/3x3/5x5 branch weight (+ biases column-folded)
    # wc_ref:  (C, 27C + 1)     combined compress weight (+ bias)
    # out_ref: (1, C, HW)
    # cat_ref: (3C, HW)         VMEM scratch holding the concatenated branch output
    _, C, HW = x_ref.shape
    C3 = 3 * C

    # Column-in-row index for horizontal boundary masks (implements the conv zero padding).
    lane_idx = jax.lax.broadcasted_iota(jnp.int32, (1, HW), 1)
    if (W & (W - 1)) == 0:
        wcol = lane_idx & (W - 1)
    else:
        wcol = lane_idx % W

    def col_mask(dw):
        ok = jnp.logical_and(wcol + dw >= 0, wcol + dw < W)
        return jnp.where(ok, 1.0, 0.0)

    masks = {dw: col_mask(dw) for dw in (-2, -1, 1, 2)}

    ones_row = jnp.ones((1, HW), jnp.float32)
    x = x_ref[0]                                   # (C, HW), lane dense

    # ---- fused 1x1 / 3x3 / 5x5 branches: one (3C, 25C+1) @ (25C+1, HW) matmul ----
    def x_window(start, size):
        return x_ref[0, :, pl.ds(start, size)]

    pieces = []
    for kh in range(5):
        for kw in range(5):
            dh, dw = kh - 2, kw - 2
            if dh == 0 and dw == 0:
                shifted = x
            else:
                shifted = _shift_cols(x_window, dh * W + dw, C, HW)
            if dw != 0:
                shifted = shifted * masks[dw]
            pieces.append(shifted)
    pieces.append(ones_row)
    x_aug = jnp.concatenate(pieces, axis=0)        # (25C + 1, HW)

    branch = jnp.dot(wb_ref[...], x_aug, preferred_element_type=jnp.float32)
    cat_ref[...] = jnp.maximum(branch, 0.0)        # (3C, HW) = [small; middle; large]

    # ---- compress 3x3 conv over the concat: one (C, 27C+1) @ (27C+1, HW) matmul ----
    def cat_window(start, size):
        return cat_ref[:, pl.ds(start, size)]

    pieces2 = []
    for kh in range(3):
        for kw in range(3):
            dh, dw = kh - 1, kw - 1
            if dh == 0 and dw == 0:
                shifted = cat_ref[...]
            else:
                shifted = _shift_cols(cat_window, dh * W + dw, C3, HW)
            if dw != 0:
                shifted = shifted * masks[dw]
            pieces2.append(shifted)
    pieces2.append(ones_row)
    cat_aug = jnp.concatenate(pieces2, axis=0)     # (27C + 1, HW)

    comp = jnp.dot(wc_ref[...], cat_aug, preferred_element_type=jnp.float32)
    comp = jnp.maximum(comp, 0.0)                  # (C, HW)

    # ---- residual add, lane-dense store ----
    out_ref[0] = x + comp


def build_combined_weights(params):
    """Pack the four conv weights (OIHW, PyTorch layout) + biases into two matmul matrices.

    Im2col row ordering is tap-major, channel-minor: row (kh*K + kw)*Cin + cin holds input
    channel `cin` at spatial offset (kh - K//2, kw - K//2); the last row is all-ones (bias).
    """
    w1, b1, w3, b3, w5, b5, wc, bc = params
    C = w1.shape[0]

    w5_cols = jnp.transpose(w5, (0, 2, 3, 1)).reshape(C, 25 * C)

    w3_grid = jnp.zeros((C, 5, 5, C), jnp.float32)
    w3_grid = w3_grid.at[:, 1:4, 1:4, :].set(jnp.transpose(w3, (0, 2, 3, 1)))
    w3_cols = w3_grid.reshape(C, 25 * C)

    w1_grid = jnp.zeros((C, 5, 5, C), jnp.float32)
    w1_grid = w1_grid.at[:, 2, 2, :].set(w1[:, :, 0, 0])
    w1_cols = w1_grid.reshape(C, 25 * C)

    wb = jnp.concatenate([
        jnp.concatenate([w1_cols, b1.reshape(C, 1)], axis=1),   # -> x_small rows
        jnp.concatenate([w3_cols, b3.reshape(C, 1)], axis=1),   # -> x_middle rows
        jnp.concatenate([w5_cols, b5.reshape(C, 1)], axis=1),   # -> x_large rows
    ], axis=0)                                                  # (3C, 25C + 1)

    wc_cols = jnp.transpose(wc, (0, 2, 3, 1)).reshape(C, 27 * C)
    wcomb = jnp.concatenate([wc_cols, bc.reshape(C, 1)], axis=1)  # (C, 27C + 1)
    return wb, wcomb


@jax.jit
def triple_pass(x_nchw, params):
    """x_nchw: (N, C, H, W) float32, PyTorch layout. params: OIHW weights + biases."""
    N, C, H, W = x_nchw.shape
    HW = H * W
    x_flat = x_nchw.reshape(N, C, HW)
    wb, wcomb = build_combined_weights(params)

    kernel = functools.partial(triple_pass_kernel, W=W)
    out_flat = pl.pallas_call(
        kernel,
        out_shape=jax.ShapeDtypeStruct((N, C, HW), jnp.float32),
        grid_spec=pltpu.PrefetchScalarGridSpec(
            num_scalar_prefetch=0,
            grid=(N,),
            in_specs=[
                pl.BlockSpec((1, C, HW), lambda n: (n, 0, 0)),
                pl.BlockSpec((3 * C, 25 * C + 1), lambda n: (0, 0)),
                pl.BlockSpec((C, 27 * C + 1), lambda n: (0, 0)),
            ],
            out_specs=pl.BlockSpec((1, C, HW), lambda n: (n, 0, 0)),
            scratch_shapes=[pltpu.VMEM((3 * C, HW), jnp.float32)],
        ),
        compiler_params=pltpu.CompilerParams(
            dimension_semantics=("parallel",),
            vmem_limit_bytes=32 * 1024 * 1024,
        ),
    )(x_flat, wb, wcomb)
    return out_flat.reshape(N, C, H, W)


def make_params(tp_feats, key):
    """Deterministic synthetic parameters in PyTorch OIHW layout."""
    C = tp_feats
    ks = jax.random.split(key, 8)
    w1 = 0.1 * jax.random.normal(ks[0], (C, C, 1, 1), jnp.float32)
    b1 = 0.1 * jax.random.normal(ks[1], (C,), jnp.float32)
    w3 = 0.1 * jax.random.normal(ks[2], (C, C, 3, 3), jnp.float32)
    b3 = 0.1 * jax.random.normal(ks[3], (C,), jnp.float32)
    w5 = 0.1 * jax.random.normal(ks[4], (C, C, 5, 5), jnp.float32)
    b5 = 0.1 * jax.random.normal(ks[5], (C,), jnp.float32)
    wc = 0.1 * jax.random.normal(ks[6], (C, 3 * C, 3, 3), jnp.float32)
    bc = 0.1 * jax.random.normal(ks[7], (C,), jnp.float32)
    return (w1, b1, w3, b3, w5, b5, wc, bc)


def triple_pass_reference(x, params):
    """Pure-JAX reference matching the PyTorch module exactly (NCHW / OIHW)."""
    w1, b1, w3, b3, w5, b5, wc, bc = params

    def conv(inp, w, b, pad):
        y = jax.lax.conv_general_dilated(
            inp, w, window_strides=(1, 1),
            padding=[(pad, pad), (pad, pad)],
            dimension_numbers=('NCHW', 'OIHW', 'NCHW'))
        return jax.nn.relu(y + b.reshape(1, -1, 1, 1))

    xs = conv(x, w1, b1, 0)
    xm = conv(x, w3, b3, 1)
    xl = conv(x, w5, b5, 2)
    cat = jnp.concatenate([xs, xm, xl], axis=1)
    comp = conv(cat, wc, bc, 1)
    return x + comp


if __name__ == "__main__":
    key = jax.random.PRNGKey(0)
    k_x, k_p = jax.random.split(key)

    N, C, H, W = 2, 4, 16, 16                       # PyTorch-style NCHW shape
    x = jax.random.normal(k_x, (N, C, H, W), jnp.float32)
    params = make_params(C, k_p)

    out = triple_pass(x, params)
    out = jax.block_until_ready(out)

    ref = triple_pass_reference(x, params)
    assert out.shape == (N, C, H, W)
    max_err = jnp.max(jnp.abs(out - ref))
    assert jnp.allclose(out, ref, rtol=2e-3, atol=2e-3), f"mismatch vs reference: {max_err}"

    print("KERNEL_OK")
</pallas_src>

<mosaic_0001>
module attributes {stable_mosaic.version = 11 : i64} {
  func.func @triple_pass_kernel(%arg0: i32, %arg1: memref<1x4x256xf32, #tpu.memory_space<vmem>>, %arg2: memref<12x101xf32, #tpu.memory_space<vmem>>, %arg3: memref<4x109xf32, #tpu.memory_space<vmem>>, %arg4: memref<1x4x256xf32, #tpu.memory_space<vmem>>, %arg5: memref<12x256xf32, #tpu.memory_space<vmem>>) attributes {dimension_semantics = [#tpu.dimension_semantics<parallel>], iteration_bounds = array<i64: 2>, scalar_prefetch = 0 : i64, scratch_operands = 1 : i64, tpu.core_type = #tpu.core_type<tc>, window_params = [{transform_indices = @transform_0, window_bounds = array<i64: 1, 4, 256>}, {pipeline_mode = #tpu.pipeline_mode<synchronous>, transform_indices = @transform_1, window_bounds = array<i64: 12, 101>}, {pipeline_mode = #tpu.pipeline_mode<synchronous>, transform_indices = @transform_2, window_bounds = array<i64: 4, 109>}, {transform_indices = @transform_3, window_bounds = array<i64: 1, 4, 256>}]} {
    %0 = tpu.iota {dimensions = array<i32: 1>} : vector<1x256xi32>
    %c15_i32 = arith.constant 15 : i32
    %1 = vector.broadcast %c15_i32 : i32 to vector<1x256xi32>
    %2 = arith.andi %0, %1 : vector<1x256xi32>
    %c-2_i32 = arith.constant -2 : i32
    %3 = vector.broadcast %c-2_i32 : i32 to vector<1x256xi32>
    %4 = arith.addi %2, %3 : vector<1x256xi32>
    %c0_i32 = arith.constant 0 : i32
    %5 = vector.broadcast %c0_i32 : i32 to vector<1x256xi32>
    %6 = arith.cmpi sge, %4, %5 : vector<1x256xi32>
    %c-2_i32_0 = arith.constant -2 : i32
    %7 = vector.broadcast %c-2_i32_0 : i32 to vector<1x256xi32>
    %8 = arith.addi %2, %7 : vector<1x256xi32>
    %c16_i32 = arith.constant 16 : i32
    %9 = vector.broadcast %c16_i32 : i32 to vector<1x256xi32>
    %10 = arith.cmpi slt, %8, %9 : vector<1x256xi32>
    %11 = arith.andi %6, %10 : vector<1x256xi1>
    %cst = arith.constant 1.000000e+00 : f32
    %cst_1 = arith.constant 0.000000e+00 : f32
    %12 = vector.broadcast %cst : f32 to vector<1x256xf32>
    %13 = vector.broadcast %cst_1 : f32 to vector<1x256xf32>
    %14 = arith.select %11, %12, %13 : vector<1x256xi1>, vector<1x256xf32>
    %c-1_i32 = arith.constant -1 : i32
    %15 = vector.broadcast %c-1_i32 : i32 to vector<1x256xi32>
    %16 = arith.addi %2, %15 : vector<1x256xi32>
    %c0_i32_2 = arith.constant 0 : i32
    %17 = vector.broadcast %c0_i32_2 : i32 to vector<1x256xi32>
    %18 = arith.cmpi sge, %16, %17 : vector<1x256xi32>
    %c-1_i32_3 = arith.constant -1 : i32
    %19 = vector.broadcast %c-1_i32_3 : i32 to vector<1x256xi32>
    %20 = arith.addi %2, %19 : vector<1x256xi32>
    %c16_i32_4 = arith.constant 16 : i32
    %21 = vector.broadcast %c16_i32_4 : i32 to vector<1x256xi32>
    %22 = arith.cmpi slt, %20, %21 : vector<1x256xi32>
    %23 = arith.andi %18, %22 : vector<1x256xi1>
    %cst_5 = arith.constant 1.000000e+00 : f32
    %cst_6 = arith.constant 0.000000e+00 : f32
    %24 = vector.broadcast %cst_5 : f32 to vector<1x256xf32>
    %25 = vector.broadcast %cst_6 : f32 to vector<1x256xf32>
    %26 = arith.select %23, %24, %25 : vector<1x256xi1>, vector<1x256xf32>
    %c1_i32 = arith.constant 1 : i32
    %27 = vector.broadcast %c1_i32 : i32 to vector<1x256xi32>
    %28 = arith.addi %2, %27 : vector<1x256xi32>
    %c0_i32_7 = arith.constant 0 : i32
    %29 = vector.broadcast %c0_i32_7 : i32 to vector<1x256xi32>
    %30 = arith.cmpi sge, %28, %29 : vector<1x256xi32>
    %c1_i32_8 = arith.constant 1 : i32
    %31 = vector.broadcast %c1_i32_8 : i32 to vector<1x256xi32>
    %32 = arith.addi %2, %31 : vector<1x256xi32>
    %c16_i32_9 = arith.constant 16 : i32
    %33 = vector.broadcast %c16_i32_9 : i32 to vector<1x256xi32>
    %34 = arith.cmpi slt, %32, %33 : vector<1x256xi32>
    %35 = arith.andi %30, %34 : vector<1x256xi1>
    %cst_10 = arith.constant 1.000000e+00 : f32
    %cst_11 = arith.constant 0.000000e+00 : f32
    %36 = vector.broadcast %cst_10 : f32 to vector<1x256xf32>
    %37 = vector.broadcast %cst_11 : f32 to vector<1x256xf32>
    %38 = arith.select %35, %36, %37 : vector<1x256xi1>, vector<1x256xf32>
    %c2_i32 = arith.constant 2 : i32
    %39 = vector.broadcast %c2_i32 : i32 to vector<1x256xi32>
    %40 = arith.addi %2, %39 : vector<1x256xi32>
    %c0_i32_12 = arith.constant 0 : i32
    %41 = vector.broadcast %c0_i32_12 : i32 to vector<1x256xi32>
    %42 = arith.cmpi sge, %40, %41 : vector<1x256xi32>
    %c2_i32_13 = arith.constant 2 : i32
    %43 = vector.broadcast %c2_i32_13 : i32 to vector<1x256xi32>
    %44 = arith.addi %2, %43 : vector<1x256xi32>
    %c16_i32_14 = arith.constant 16 : i32
    %45 = vector.broadcast %c16_i32_14 : i32 to vector<1x256xi32>
    %46 = arith.cmpi slt, %44, %45 : vector<1x256xi32>
    %47 = arith.andi %42, %46 : vector<1x256xi1>
    %cst_15 = arith.constant 1.000000e+00 : f32
    %cst_16 = arith.constant 0.000000e+00 : f32
    %48 = vector.broadcast %cst_15 : f32 to vector<1x256xf32>
    %49 = vector.broadcast %cst_16 : f32 to vector<1x256xf32>
    %50 = arith.select %47, %48, %49 : vector<1x256xi1>, vector<1x256xf32>
    %cst_17 = arith.constant 1.000000e+00 : f32
    %51 = vector.broadcast %cst_17 : f32 to vector<1x256xf32>
    %c0 = arith.constant 0 : index
    %c0_18 = arith.constant 0 : index
    %c0_19 = arith.constant 0 : index
    %52 = vector.load %arg1[%c0, %c0_18, %c0_19] : memref<1x4x256xf32, #tpu.memory_space<vmem>>, vector<1x4x256xf32>
    %53 = vector.shape_cast %52 : vector<1x4x256xf32> to vector<4x256xf32>
    %c0_20 = arith.constant 0 : index
    %c0_21 = arith.constant 0 : index
    %c0_22 = arith.constant 0 : index
    %54 = vector.load %arg1[%c0_20, %c0_21, %c0_22] : memref<1x4x256xf32, #tpu.memory_space<vmem>>, vector<1x4x222xf32>
    %55 = vector.shape_cast %54 : vector<1x4x222xf32> to vector<4x222xf32>
    %cst_23 = arith.constant 0.000000e+00 : f32
    %56 = vector.broadcast %cst_23 : f32 to vector<4x34xf32>
    %57 = tpu.concatenate %56, %55 in 1 : vector<4x34xf32>, vector<4x222xf32> -> vector<4x256xf32>
    %58 = vector.broadcast %14 : vector<1x256xf32> to vector<4x256xf32>
    %59 = arith.mulf %57, %58 : vector<4x256xf32>
    %c0_24 = arith.constant 0 : index
    %c0_25 = arith.constant 0 : index
    %c0_26 = arith.constant 0 : index
    %60 = vector.load %arg1[%c0_24, %c0_25, %c0_26] : memref<1x4x256xf32, #tpu.memory_space<vmem>>, vector<1x4x223xf32>
    %61 = vector.shape_cast %60 : vector<1x4x223xf32> to vector<4x223xf32>
    %cst_27 = arith.constant 0.000000e+00 : f32
    %62 = vector.broadcast %cst_27 : f32 to vector<4x33xf32>
    %63 = tpu.concatenate %62, %61 in 1 : vector<4x33xf32>, vector<4x223xf32> -> vector<4x256xf32>
    %64 = vector.broadcast %26 : vector<1x256xf32> to vector<4x256xf32>
    %65 = arith.mulf %63, %64 : vector<4x256xf32>
    %c0_28 = arith.constant 0 : index
    %c0_29 = arith.constant 0 : index
    %c0_30 = arith.constant 0 : index
    %66 = vector.load %arg1[%c0_28, %c0_29, %c0_30] : memref<1x4x256xf32, #tpu.memory_space<vmem>>, vector<1x4x224xf32>
    %67 = vector.shape_cast %66 : vector<1x4x224xf32> to vector<4x224xf32>
    %cst_31 = arith.constant 0.000000e+00 : f32
    %68 = vector.broadcast %cst_31 : f32 to vector<4x32xf32>
    %69 = tpu.concatenate %68, %67 in 1 : vector<4x32xf32>, vector<4x224xf32> -> vector<4x256xf32>
    %c0_32 = arith.constant 0 : index
    %c0_33 = arith.constant 0 : index
    %c0_34 = arith.constant 0 : index
    %70 = vector.load %arg1[%c0_32, %c0_33, %c0_34] : memref<1x4x256xf32, #tpu.memory_space<vmem>>, vector<1x4x225xf32>
    %71 = vector.shape_cast %70 : vector<1x4x225xf32> to vector<4x225xf32>
    %cst_35 = arith.constant 0.000000e+00 : f32
    %72 = vector.broadcast %cst_35 : f32 to vector<4x31xf32>
    %73 = tpu.concatenate %72, %71 in 1 : vector<4x31xf32>, vector<4x225xf32> -> vector<4x256xf32>
    %74 = vector.broadcast %38 : vector<1x256xf32> to vector<4x256xf32>
    %75 = arith.mulf %73, %74 : vector<4x256xf32>
    %c0_36 = arith.constant 0 : index
    %c0_37 = arith.constant 0 : index
    %c0_38 = arith.constant 0 : index
    %76 = vector.load %arg1[%c0_36, %c0_37, %c0_38] : memref<1x4x256xf32, #tpu.memory_space<vmem>>, vector<1x4x226xf32>
    %77 = vector.shape_cast %76 : vector<1x4x226xf32> to vector<4x226xf32>
    %cst_39 = arith.constant 0.000000e+00 : f32
    %78 = vector.broadcast %cst_39 : f32 to vector<4x30xf32>
    %79 = tpu.concatenate %78, %77 in 1 : vector<4x30xf32>, vector<4x226xf32> -> vector<4x256xf32>
    %80 = vector.broadcast %50 : vector<1x256xf32> to vector<4x256xf32>
    %81 = arith.mulf %79, %80 : vector<4x256xf32>
    %c0_40 = arith.constant 0 : index
    %c0_41 = arith.constant 0 : index
    %c0_42 = arith.constant 0 : index
    %82 = vector.load %arg1[%c0_40, %c0_41, %c0_42] : memref<1x4x256xf32, #tpu.memory_space<vmem>>, vector<1x4x238xf32>
    %83 = vector.shape_cast %82 : vector<1x4x238xf32> to vector<4x238xf32>
    %cst_43 = arith.constant 0.000000e+00 : f32
    %84 = vector.broadcast %cst_43 : f32 to vector<4x18xf32>
    %85 = tpu.concatenate %84, %83 in 1 : vector<4x18xf32>, vector<4x238xf32> -> vector<4x256xf32>
    %86 = vector.broadcast %14 : vector<1x256xf32> to vector<4x256xf32>
    %87 = arith.mulf %85, %86 : vector<4x256xf32>
    %c0_44 = arith.constant 0 : index
    %c0_45 = arith.constant 0 : index
    %c0_46 = arith.constant 0 : index
    %88 = vector.load %arg1[%c0_44, %c0_45, %c0_46] : memref<1x4x256xf32, #tpu.memory_space<vmem>>, vector<1x4x239xf32>
    %89 = vector.shape_cast %88 : vector<1x4x239xf32> to vector<4x239xf32>
    %cst_47 = arith.constant 0.000000e+00 : f32
    %90 = vector.broadcast %cst_47 : f32 to vector<4x17xf32>
    %91 = tpu.concatenate %90, %89 in 1 : vector<4x17xf32>, vector<4x239xf32> -> vector<4x256xf32>
    %92 = vector.broadcast %26 : vector<1x256xf32> to vector<4x256xf32>
    %93 = arith.mulf %91, %92 : vector<4x256xf32>
    %c0_48 = arith.constant 0 : index
    %c0_49 = arith.constant 0 : index
    %c0_50 = arith.constant 0 : index
    %94 = vector.load %arg1[%c0_48, %c0_49, %c0_50] : memref<1x4x256xf32, #tpu.memory_space<vmem>>, vector<1x4x240xf32>
    %95 = vector.shape_cast %94 : vector<1x4x240xf32> to vector<4x240xf32>
    %cst_51 = arith.constant 0.000000e+00 : f32
    %96 = vector.broadcast %cst_51 : f32 to vector<4x16xf32>
    %97 = tpu.concatenate %96, %95 in 1 : vector<4x16xf32>, vector<4x240xf32> -> vector<4x256xf32>
    %c0_52 = arith.constant 0 : index
    %c0_53 = arith.constant 0 : index
    %c0_54 = arith.constant 0 : index
    %98 = vector.load %arg1[%c0_52, %c0_53, %c0_54] : memref<1x4x256xf32, #tpu.memory_space<vmem>>, vector<1x4x241xf32>
    %99 = vector.shape_cast %98 : vector<1x4x241xf32> to vector<4x241xf32>
    %cst_55 = arith.constant 0.000000e+00 : f32
    %100 = vector.broadcast %cst_55 : f32 to vector<4x15xf32>
    %101 = tpu.concatenate %100, %99 in 1 : vector<4x15xf32>, vector<4x241xf32> -> vector<4x256xf32>
    %102 = vector.broadcast %38 : vector<1x256xf32> to vector<4x256xf32>
    %103 = arith.mulf %101, %102 : vector<4x256xf32>
    %c0_56 = arith.constant 0 : index
    %c0_57 = arith.constant 0 : index
    %c0_58 = arith.constant 0 : index
    %104 = vector.load %arg1[%c0_56, %c0_57, %c0_58] : memref<1x4x256xf32, #tpu.memory_space<vmem>>, vector<1x4x242xf32>
    %105 = vector.shape_cast %104 : vector<1x4x242xf32> to vector<4x242xf32>
    %cst_59 = arith.constant 0.000000e+00 : f32
    %106 = vector.broadcast %cst_59 : f32 to vector<4x14xf32>
    %107 = tpu.concatenate %106, %105 in 1 : vector<4x14xf32>, vector<4x242xf32> -> vector<4x256xf32>
    %108 = vector.broadcast %50 : vector<1x256xf32> to vector<4x256xf32>
    %109 = arith.mulf %107, %108 : vector<4x256xf32>
    %c0_60 = arith.constant 0 : index
    %c0_61 = arith.constant 0 : index
    %c0_62 = arith.constant 0 : index
    %110 = vector.load %arg1[%c0_60, %c0_61, %c0_62] : memref<1x4x256xf32, #tpu.memory_space<vmem>>, vector<1x4x254xf32>
    %111 = vector.shape_cast %110 : vector<1x4x254xf32> to vector<4x254xf32>
    %cst_63 = arith.constant 0.000000e+00 : f32
    %112 = vector.broadcast %cst_63 : f32 to vector<4x2xf32>
    %113 = tpu.concatenate %112, %111 in 1 : vector<4x2xf32>, vector<4x254xf32> -> vector<4x256xf32>
    %114 = vector.broadcast %14 : vector<1x256xf32> to vector<4x256xf32>
    %115 = arith.mulf %113, %114 : vector<4x256xf32>
    %c0_64 = arith.constant 0 : index
    %c0_65 = arith.constant 0 : index
    %c0_66 = arith.constant 0 : index
    %116 = vector.load %arg1[%c0_64, %c0_65, %c0_66] : memref<1x4x256xf32, #tpu.memory_space<vmem>>, vector<1x4x255xf32>
    %117 = vector.shape_cast %116 : vector<1x4x255xf32> to vector<4x255xf32>
    %cst_67 = arith.constant 0.000000e+00 : f32
    %118 = vector.broadcast %cst_67 : f32 to vector<4x1xf32>
    %119 = tpu.concatenate %118, %117 in 1 : vector<4x1xf32>, vector<4x255xf32> -> vector<4x256xf32>
    %120 = vector.broadcast %26 : vector<1x256xf32> to vector<4x256xf32>
    %121 = arith.mulf %119, %120 : vector<4x256xf32>
    %c0_68 = arith.constant 0 : index
    %c0_69 = arith.constant 0 : index
    %c1 = arith.constant 1 : index
    %122 = vector.load %arg1[%c0_68, %c0_69, %c1] : memref<1x4x256xf32, #tpu.memory_space<vmem>>, vector<1x4x255xf32>
    %123 = vector.shape_cast %122 : vector<1x4x255xf32> to vector<4x255xf32>
    %cst_70 = arith.constant 0.000000e+00 : f32
    %124 = vector.broadcast %cst_70 : f32 to vector<4x1xf32>
    %125 = tpu.concatenate %123, %124 in 1 : vector<4x255xf32>, vector<4x1xf32> -> vector<4x256xf32>
    %126 = vector.broadcast %38 : vector<1x256xf32> to vector<4x256xf32>
    %127 = arith.mulf %125, %126 : vector<4x256xf32>
    %c0_71 = arith.constant 0 : index
    %c0_72 = arith.constant 0 : index
    %c2 = arith.constant 2 : index
    %128 = vector.load %arg1[%c0_71, %c0_72, %c2] : memref<1x4x256xf32, #tpu.memory_space<vmem>>, vector<1x4x254xf32>
    %129 = vector.shape_cast %128 : vector<1x4x254xf32> to vector<4x254xf32>
    %cst_73 = arith.constant 0.000000e+00 : f32
    %130 = vector.broadcast %cst_73 : f32 to vector<4x2xf32>
    %131 = tpu.concatenate %129, %130 in 1 : vector<4x254xf32>, vector<4x2xf32> -> vector<4x256xf32>
    %132 = vector.broadcast %50 : vector<1x256xf32> to vector<4x256xf32>
    %133 = arith.mulf %131, %132 : vector<4x256xf32>
    %c0_74 = arith.constant 0 : index
    %c0_75 = arith.constant 0 : index
    %c14 = arith.constant 14 : index
    %134 = vector.load %arg1[%c0_74, %c0_75, %c14] : memref<1x4x256xf32, #tpu.memory_space<vmem>>, vector<1x4x242xf32>
    %135 = vector.shape_cast %134 : vector<1x4x242xf32> to vector<4x242xf32>
    %cst_76 = arith.constant 0.000000e+00 : f32
    %136 = vector.broadcast %cst_76 : f32 to vector<4x14xf32>
    %137 = tpu.concatenate %135, %136 in 1 : vector<4x242xf32>, vector<4x14xf32> -> vector<4x256xf32>
    %138 = vector.broadcast %14 : vector<1x256xf32> to vector<4x256xf32>
    %139 = arith.mulf %137, %138 : vector<4x256xf32>
    %c0_77 = arith.constant 0 : index
    %c0_78 = arith.constant 0 : index
    %c15 = arith.constant 15 : index
    %140 = vector.load %arg1[%c0_77, %c0_78, %c15] : memref<1x4x256xf32, #tpu.memory_space<vmem>>, vector<1x4x241xf32>
    %141 = vector.shape_cast %140 : vector<1x4x241xf32> to vector<4x241xf32>
    %cst_79 = arith.constant 0.000000e+00 : f32
    %142 = vector.broadcast %cst_79 : f32 to vector<4x15xf32>
    %143 = tpu.concatenate %141, %142 in 1 : vector<4x241xf32>, vector<4x15xf32> -> vector<4x256xf32>
    %144 = vector.broadcast %26 : vector<1x256xf32> to vector<4x256xf32>
    %145 = arith.mulf %143, %144 : vector<4x256xf32>
    %c0_80 = arith.constant 0 : index
    %c0_81 = arith.constant 0 : index
    %c16 = arith.constant 16 : index
    %146 = vector.load %arg1[%c0_80, %c0_81, %c16] : memref<1x4x256xf32, #tpu.memory_space<vmem>>, vector<1x4x240xf32>
    %147 = vector.shape_cast %146 : vector<1x4x240xf32> to vector<4x240xf32>
    %cst_82 = arith.constant 0.000000e+00 : f32
    %148 = vector.broadcast %cst_82 : f32 to vector<4x16xf32>
    %149 = tpu.concatenate %147, %148 in 1 : vector<4x240xf32>, vector<4x16xf32> -> vector<4x256xf32>
    %c0_83 = arith.constant 0 : index
    %c0_84 = arith.constant 0 : index
    %c17 = arith.constant 17 : index
    %150 = vector.load %arg1[%c0_83, %c0_84, %c17] : memref<1x4x256xf32, #tpu.memory_space<vmem>>, vector<1x4x239xf32>
    %151 = vector.shape_cast %150 : vector<1x4x239xf32> to vector<4x239xf32>
    %cst_85 = arith.constant 0.000000e+00 : f32
    %152 = vector.broadcast %cst_85 : f32 to vector<4x17xf32>
    %153 = tpu.concatenate %151, %152 in 1 : vector<4x239xf32>, vector<4x17xf32> -> vector<4x256xf32>
    %154 = vector.broadcast %38 : vector<1x256xf32> to vector<4x256xf32>
    %155 = arith.mulf %153, %154 : vector<4x256xf32>
    %c0_86 = arith.constant 0 : index
    %c0_87 = arith.constant 0 : index
    %c18 = arith.constant 18 : index
    %156 = vector.load %arg1[%c0_86, %c0_87, %c18] : memref<1x4x256xf32, #tpu.memory_space<vmem>>, vector<1x4x238xf32>
    %157 = vector.shape_cast %156 : vector<1x4x238xf32> to vector<4x238xf32>
    %cst_88 = arith.constant 0.000000e+00 : f32
    %158 = vector.broadcast %cst_88 : f32 to vector<4x18xf32>
    %159 = tpu.concatenate %157, %158 in 1 : vector<4x238xf32>, vector<4x18xf32> -> vector<4x256xf32>
    %160 = vector.broadcast %50 : vector<1x256xf32> to vector<4x256xf32>
    %161 = arith.mulf %159, %160 : vector<4x256xf32>
    %c0_89 = arith.constant 0 : index
    %c0_90 = arith.constant 0 : index
    %c30 = arith.constant 30 : index
    %162 = vector.load %arg1[%c0_89, %c0_90, %c30] : memref<1x4x256xf32, #tpu.memory_space<vmem>>, vector<1x4x226xf32>
    %163 = vector.shape_cast %162 : vector<1x4x226xf32> to vector<4x226xf32>
    %cst_91 = arith.constant 0.000000e+00 : f32
    %164 = vector.broadcast %cst_91 : f32 to vector<4x30xf32>
    %165 = tpu.concatenate %163, %164 in 1 : vector<4x226xf32>, vector<4x30xf32> -> vector<4x256xf32>
    %166 = vector.broadcast %14 : vector<1x256xf32> to vector<4x256xf32>
    %167 = arith.mulf %165, %166 : vector<4x256xf32>
    %c0_92 = arith.constant 0 : index
    %c0_93 = arith.constant 0 : index
    %c31 = arith.constant 31 : index
    %168 = vector.load %arg1[%c0_92, %c0_93, %c31] : memref<1x4x256xf32, #tpu.memory_space<vmem>>, vector<1x4x225xf32>
    %169 = vector.shape_cast %168 : vector<1x4x225xf32> to vector<4x225xf32>
    %cst_94 = arith.constant 0.000000e+00 : f32
    %170 = vector.broadcast %cst_94 : f32 to vector<4x31xf32>
    %171 = tpu.concatenate %169, %170 in 1 : vector<4x225xf32>, vector<4x31xf32> -> vector<4x256xf32>
    %172 = vector.broadcast %26 : vector<1x256xf32> to vector<4x256xf32>
    %173 = arith.mulf %171, %172 : vector<4x256xf32>
    %c0_95 = arith.constant 0 : index
    %c0_96 = arith.constant 0 : index
    %c32 = arith.constant 32 : index
    %174 = vector.load %arg1[%c0_95, %c0_96, %c32] : memref<1x4x256xf32, #tpu.memory_space<vmem>>, vector<1x4x224xf32>
    %175 = vector.shape_cast %174 : vector<1x4x224xf32> to vector<4x224xf32>
    %cst_97 = arith.constant 0.000000e+00 : f32
    %176 = vector.broadcast %cst_97 : f32 to vector<4x32xf32>
    %177 = tpu.concatenate %175, %176 in 1 : vector<4x224xf32>, vector<4x32xf32> -> vector<4x256xf32>
    %c0_98 = arith.constant 0 : index
    %c0_99 = arith.constant 0 : index
    %c33 = arith.constant 33 : index
    %178 = vector.load %arg1[%c0_98, %c0_99, %c33] : memref<1x4x256xf32, #tpu.memory_space<vmem>>, vector<1x4x223xf32>
    %179 = vector.shape_cast %178 : vector<1x4x223xf32> to vector<4x223xf32>
    %cst_100 = arith.constant 0.000000e+00 : f32
    %180 = vector.broadcast %cst_100 : f32 to vector<4x33xf32>
    %181 = tpu.concatenate %179, %180 in 1 : vector<4x223xf32>, vector<4x33xf32> -> vector<4x256xf32>
    %182 = vector.broadcast %38 : vector<1x256xf32> to vector<4x256xf32>
    %183 = arith.mulf %181, %182 : vector<4x256xf32>
    %c0_101 = arith.constant 0 : index
    %c0_102 = arith.constant 0 : index
    %c34 = arith.constant 34 : index
    %184 = vector.load %arg1[%c0_101, %c0_102, %c34] : memref<1x4x256xf32, #tpu.memory_space<vmem>>, vector<1x4x222xf32>
    %185 = vector.shape_cast %184 : vector<1x4x222xf32> to vector<4x222xf32>
    %cst_103 = arith.constant 0.000000e+00 : f32
    %186 = vector.broadcast %cst_103 : f32 to vector<4x34xf32>
    %187 = tpu.concatenate %185, %186 in 1 : vector<4x222xf32>, vector<4x34xf32> -> vector<4x256xf32>
    %188 = vector.broadcast %50 : vector<1x256xf32> to vector<4x256xf32>
    %189 = arith.mulf %187, %188 : vector<4x256xf32>
    %190 = tpu.concatenate %59, %65, %69, %75, %81, %87, %93, %97, %103, %109, %115, %121, %53, %127, %133, %139 in 0 : vector<4x256xf32>, vector<4x256xf32>, vector<4x256xf32>, vector<4x256xf32>, vector<4x256xf32>, vector<4x256xf32>, vector<4x256xf32>, vector<4x256xf32>, vector<4x256xf32>, vector<4x256xf32>, vector<4x256xf32>, vector<4x256xf32>, vector<4x256xf32>, vector<4x256xf32>, vector<4x256xf32>, vector<4x256xf32> -> vector<64x256xf32>
    %191 = tpu.concatenate %145, %149, %155, %161, %167, %173, %177, %183, %189, %51 in 0 : vector<4x256xf32>, vector<4x256xf32>, vector<4x256xf32>, vector<4x256xf32>, vector<4x256xf32>, vector<4x256xf32>, vector<4x256xf32>, vector<4x256xf32>, vector<4x256xf32>, vector<1x256xf32> -> vector<37x256xf32>
    %192 = tpu.concatenate %190, %191 in 0 : vector<64x256xf32>, vector<37x256xf32> -> vector<101x256xf32>
    %c0_104 = arith.constant 0 : index
    %c0_105 = arith.constant 0 : index
    %193 = vector.load %arg2[%c0_104, %c0_105] : memref<12x101xf32, #tpu.memory_space<vmem>>, vector<12x101xf32>
    %cst_106 = arith.constant dense<0.000000e+00> : vector<12x256xf32>
    %194 = tpu.matmul %193, %192, %cst_106 {dimension_numbers = #tpu.dot_dimension_numbers<[1], [0], [0], [1], [0, 0, 1, 1], [], []>} : vector<12x101xf32>, vector<101x256xf32>, vector<12x256xf32> -> vector<12x256xf32>
    %cst_107 = arith.constant 0.000000e+00 : f32
    %195 = vector.broadcast %cst_107 : f32 to vector<12x256xf32>
    %196 = arith.maximumf %194, %195 : vector<12x256xf32>
    %c0_108 = arith.constant 0 : index
    %c0_109 = arith.constant 0 : index
    %197 = vector.load %arg5[%c0_108, %c0_109] : memref<12x256xf32, #tpu.memory_space<vmem>>, vector<12x256xf32>
    tpu.vector_store %arg5[%c0_108, %c0_109], %196 {strides = array<i32>} : memref<12x256xf32, #tpu.memory_space<vmem>>, vector<12x256xf32>,
    %c0_110 = arith.constant 0 : index
    %c0_111 = arith.constant 0 : index
    %198 = vector.load %arg5[%c0_110, %c0_111] : memref<12x256xf32, #tpu.memory_space<vmem>>, vector<12x239xf32>
    %cst_112 = arith.constant 0.000000e+00 : f32
    %199 = vector.broadcast %cst_112 : f32 to vector<12x17xf32>
    %200 = tpu.concatenate %199, %198 in 1 : vector<12x17xf32>, vector<12x239xf32> -> vector<12x256xf32>
    %201 = vector.broadcast %26 : vector<1x256xf32> to vector<12x256xf32>
    %202 = arith.mulf %200, %201 : vector<12x256xf32>
    %c0_113 = arith.constant 0 : index
    %c0_114 = arith.constant 0 : index
    %203 = vector.load %arg5[%c0_113, %c0_114] : memref<12x256xf32, #tpu.memory_space<vmem>>, vector<12x240xf32>
    %cst_115 = arith.constant 0.000000e+00 : f32
    %204 = vector.broadcast %cst_115 : f32 to vector<12x16xf32>
    %205 = tpu.concatenate %204, %203 in 1 : vector<12x16xf32>, vector<12x240xf32> -> vector<12x256xf32>
    %c0_116 = arith.constant 0 : index
    %c0_117 = arith.constant 0 : index
    %206 = vector.load %arg5[%c0_116, %c0_117] : memref<12x256xf32, #tpu.memory_space<vmem>>, vector<12x241xf32>
    %cst_118 = arith.constant 0.000000e+00 : f32
    %207 = vector.broadcast %cst_118 : f32 to vector<12x15xf32>
    %208 = tpu.concatenate %207, %206 in 1 : vector<12x15xf32>, vector<12x241xf32> -> vector<12x256xf32>
    %209 = vector.broadcast %38 : vector<1x256xf32> to vector<12x256xf32>
    %210 = arith.mulf %208, %209 : vector<12x256xf32>
    %c0_119 = arith.constant 0 : index
    %c0_120 = arith.constant 0 : index
    %211 = vector.load %arg5[%c0_119, %c0_120] : memref<12x256xf32, #tpu.memory_space<vmem>>, vector<12x255xf32>
    %cst_121 = arith.constant 0.000000e+00 : f32
    %212 = vector.broadcast %cst_121 : f32 to vector<12x1xf32>
    %213 = tpu.concatenate %212, %211 in 1 : vector<12x1xf32>, vector<12x255xf32> -> vector<12x256xf32>
    %214 = vector.broadcast %26 : vector<1x256xf32> to vector<12x256xf32>
    %215 = arith.mulf %213, %214 : vector<12x256xf32>
    %c0_122 = arith.constant 0 : index
    %c0_123 = arith.constant 0 : index
    %216 = vector.load %arg5[%c0_122, %c0_123] : memref<12x256xf32, #tpu.memory_space<vmem>>, vector<12x256xf32>
    %c0_124 = arith.constant 0 : index
    %c1_125 = arith.constant 1 : index
    %217 = vector.load %arg5[%c0_124, %c1_125] : memref<12x256xf32, #tpu.memory_space<vmem>>, vector<12x255xf32>
    %cst_126 = arith.constant 0.000000e+00 : f32
    %218 = vector.broadcast %cst_126 : f32 to vector<12x1xf32>
    %219 = tpu.concatenate %217, %218 in 1 : vector<12x255xf32>, vector<12x1xf32> -> vector<12x256xf32>
    %220 = vector.broadcast %38 : vector<1x256xf32> to vector<12x256xf32>
    %221 = arith.mulf %219, %220 : vector<12x256xf32>
    %c0_127 = arith.constant 0 : index
    %c15_128 = arith.constant 15 : index
    %222 = vector.load %arg5[%c0_127, %c15_128] : memref<12x256xf32, #tpu.memory_space<vmem>>, vector<12x241xf32>
    %cst_129 = arith.constant 0.000000e+00 : f32
    %223 = vector.broadcast %cst_129 : f32 to vector<12x15xf32>
    %224 = tpu.concatenate %222, %223 in 1 : vector<12x241xf32>, vector<12x15xf32> -> vector<12x256xf32>
    %225 = vector.broadcast %26 : vector<1x256xf32> to vector<12x256xf32>
    %226 = arith.mulf %224, %225 : vector<12x256xf32>
    %c0_130 = arith.constant 0 : index
    %c16_131 = arith.constant 16 : index
    %227 = vector.load %arg5[%c0_130, %c16_131] : memref<12x256xf32, #tpu.memory_space<vmem>>, vector<12x240xf32>
    %cst_132 = arith.constant 0.000000e+00 : f32
    %228 = vector.broadcast %cst_132 : f32 to vector<12x16xf32>
    %229 = tpu.concatenate %227, %228 in 1 : vector<12x240xf32>, vector<12x16xf32> -> vector<12x256xf32>
    %c0_133 = arith.constant 0 : index
    %c17_134 = arith.constant 17 : index
    %230 = vector.load %arg5[%c0_133, %c17_134] : memref<12x256xf32, #tpu.memory_space<vmem>>, vector<12x239xf32>
    %cst_135 = arith.constant 0.000000e+00 : f32
    %231 = vector.broadcast %cst_135 : f32 to vector<12x17xf32>
    %232 = tpu.concatenate %230, %231 in 1 : vector<12x239xf32>, vector<12x17xf32> -> vector<12x256xf32>
    %233 = vector.broadcast %38 : vector<1x256xf32> to vector<12x256xf32>
    %234 = arith.mulf %232, %233 : vector<12x256xf32>
    %235 = tpu.concatenate %202, %205, %210, %215, %216, %221, %226, %229, %234, %51 in 0 : vector<12x256xf32>, vector<12x256xf32>, vector<12x256xf32>, vector<12x256xf32>, vector<12x256xf32>, vector<12x256xf32>, vector<12x256xf32>, vector<12x256xf32>, vector<12x256xf32>, vector<1x256xf32> -> vector<109x256xf32>
    %c0_136 = arith.constant 0 : index
    %c0_137 = arith.constant 0 : index
    %236 = vector.load %arg3[%c0_136, %c0_137] : memref<4x109xf32, #tpu.memory_space<vmem>>, vector<4x109xf32>
    %cst_138 = arith.constant dense<0.000000e+00> : vector<4x256xf32>
    %237 = tpu.matmul %236, %235, %cst_138 {dimension_numbers = #tpu.dot_dimension_numbers<[1], [0], [0], [1], [0, 0, 1, 1], [], []>} : vector<4x109xf32>, vector<109x256xf32>, vector<4x256xf32> -> vector<4x256xf32>
    %cst_139 = arith.constant 0.000000e+00 : f32
    %238 = vector.broadcast %cst_139 : f32 to vector<4x256xf32>
    %239 = arith.maximumf %237, %238 : vector<4x256xf32>
    %240 = arith.addf %53, %239 : vector<4x256xf32>
    %c0_140 = arith.constant 0 : index
    %c0_141 = arith.constant 0 : index
    %c0_142 = arith.constant 0 : index
    %241 = vector.load %arg4[%c0_140, %c0_141, %c0_142] : memref<1x4x256xf32, #tpu.memory_space<vmem>>, vector<1x4x256xf32>
    %242 = vector.shape_cast %241 : vector<1x4x256xf32> to vector<4x256xf32>
    %243 = vector.shape_cast %240 : vector<4x256xf32> to vector<1x4x256xf32>
    tpu.vector_store %arg4[%c0_140, %c0_141, %c0_142], %243 {strides = array<i32>} : memref<1x4x256xf32, #tpu.memory_space<vmem>>, vector<1x4x256xf32>,
    return
  }
  func.func @transform_0(%arg0: i32) -> (i32, i32, i32) {
    %c0_i32 = arith.constant 0 : i32
    %c0_i32_0 = arith.constant 0 : i32
    %c0_i32_1 = arith.constant 0 : i32
    return %arg0, %c0_i32, %c0_i32_0 : i32, i32, i32
  }
  func.func @transform_1(%arg0: i32) -> (i32, i32) {
    %c0_i32 = arith.constant 0 : i32
    %c0_i32_0 = arith.constant 0 : i32
    %c0_i32_1 = arith.constant 0 : i32
    return %c0_i32, %c0_i32_0 : i32, i32
  }
  func.func @transform_2(%arg0: i32) -> (i32, i32) {
    %c0_i32 = arith.constant 0 : i32
    %c0_i32_0 = arith.constant 0 : i32
    %c0_i32_1 = arith.constant 0 : i32
    return %c0_i32, %c0_i32_0 : i32, i32
  }
  func.func @transform_3(%arg0: i32) -> (i32, i32, i32) {
    %c0_i32 = arith.constant 0 : i32
    %c0_i32_0 = arith.constant 0 : i32
    %c0_i32_1 = arith.constant 0 : i32
    return %arg0, %c0_i32, %c0_i32_0 : i32, i32, i32
  }
}

</mosaic_0001>

<llo_original>
// kernel: triple_pass.1
$region0: #{triple_pass.1}
  #allocation0 [shape = 'u32[]', space=smem, size = 0x4, offset = 0x4, fixed_abs, tag = 'smem constant byte address 0x4 - core index']
  #allocation1 [shape = 'u32[72,128]{1,0:T(1,128)}', space=vmem, size = 0x9000, scoped, tag = 'internal scratch']
  #allocation2 [shape = 'f32[12,256]{1,0:T(8,128)}', space=vmem, size = 0x4000, scoped, tag = 'scratch operand']
  %s0 = inlined_call_operand.vmem [shape: f32[2,4,256], index: 0, kind: input, shape index: {}]
  %s1 = inlined_call_operand.vmem [shape: f32[12,101], index: 1, kind: input, shape index: {}]
  %s2 = inlined_call_operand.vmem [shape: f32[4,109], index: 2, kind: input, shape index: {}]
  %s3 = inlined_call_operand.vmem [shape: f32[2,4,256], index: 3, kind: output, shape index: {}]
  %s4 = sld [smem:[#allocation0]]
  $region45: #{triple_pass.1} parent=0
    _
  %s6 = ssub.s32 1, %s4
  %s7 = scalar_select 0, %s6, %s4
  loop: start=0, step=1, limit=4
  $region2: #{triple_pass.1} parent=0 // loop_pre_header
    _
  $region3: #{triple_pass.1} parent=0 // loop_header
    %s9 = sphi 0, %s13
    %p10 = scmp.ge.s32.totalorder %s9, 4
    %s19 = sphi 0, %s21
    %s22 = sphi 0, %s19
    %s23 = sphi 0, %s22
    %s39 = sphi 0, %s23
    %s43 = sphi 0, %s43
    %s45 = sphi 0, %s43
    %s46 = sphi 0, %s45
    %s60 = sphi 0, %s46
    %s64 = sphi 0, %s64
    %s66 = sphi 0, %s64
    %s67 = sphi 0, %s66
    %s81 = sphi 0, %s67
    %s87 = sphi 0, %s89
    %s90 = sphi 0, %s87
    %s91 = sphi 0, %s90
    %s107 = sphi 0, %s91
  $region4: #{triple_pass.1} parent=0 // loop_header_branch
    %12 = sbr.rel (%p10) target = $region8
  $region5: #{triple_pass.1} parent=0 // loop_body
    %s14 = ssub.s32 %s9, 1
    %s15 = ssub.s32 %s9, 2
    %s16 = sadd.s32 %s9, 1
    %s17 = ssub.s32 %s9, %s16
    %p18 = scmp.eq.s32.totalorder %s17, 0
    %s20 = sadd.s32 %s19, 1
    %s21 = scalar_select %p18, %s19, %s20
    %p24 = pneg %p18
    %p25 = scmp.eq.s32.totalorder %s9, 1
    %p26 = por %p24, %p25
    %p27 = scmp.ne.s32.totalorder %s19, %s22
    %p28 = scmp.eq.s32.totalorder %s9, 0
    %p29 = por %p27, %p28
    %p30 = scmp.ne.s32.totalorder %s19, %s22
    %p31 = scmp.eq.s32.totalorder %s14, 1
    %p32 = por %p30, %p31
    %p33 = scmp.ne.s32.totalorder %s22, %s23
    %p34 = scmp.eq.s32.totalorder %s14, 0
    %p35 = por %p33, %p34
    %p36 = scmp.ne.s32.totalorder %s22, %s23
    %p37 = scmp.eq.s32.totalorder %s15, 1
    %p38 = por %p36, %p37
    %p40 = scmp.ne.s32.totalorder %s23, %s39
    %p41 = scmp.eq.s32.totalorder %s15, 0
    %p42 = por %p40, %p41
    %s44 = sadd.s32 %s43, 1
    %p47 = scmp.eq.s32.totalorder %s9, 1
    %p48 = scmp.ne.s32.totalorder %s43, %s45
    %p49 = scmp.eq.s32.totalorder %s9, 0
    %p50 = por %p48, %p49
    %p51 = scmp.ne.s32.totalorder %s43, %s45
    %p52 = scmp.eq.s32.totalorder %s14, 1
    %p53 = por %p51, %p52
    %p54 = scmp.ne.s32.totalorder %s45, %s46
    %p55 = scmp.eq.s32.totalorder %s14, 0
    %p56 = por %p54, %p55
    %p57 = scmp.ne.s32.totalorder %s45, %s46
    %p58 = scmp.eq.s32.totalorder %s15, 1
    %p59 = por %p57, %p58
    %p61 = scmp.ne.s32.totalorder %s46, %s60
    %p62 = scmp.eq.s32.totalorder %s15, 0
    %p63 = por %p61, %p62
    %s65 = sadd.s32 %s64, 1
    %p68 = scmp.eq.s32.totalorder %s9, 1
    %p69 = scmp.ne.s32.totalorder %s64, %s66
    %p70 = scmp.eq.s32.totalorder %s9, 0
    %p71 = por %p69, %p70
    %p72 = scmp.ne.s32.totalorder %s64, %s66
    %p73 = scmp.eq.s32.totalorder %s14, 1
    %p74 = por %p72, %p73
    %p75 = scmp.ne.s32.totalorder %s66, %s67
    %p76 = scmp.eq.s32.totalorder %s14, 0
    %p77 = por %p75, %p76
    %p78 = scmp.ne.s32.totalorder %s66, %s67
    %p79 = scmp.eq.s32.totalorder %s15, 1
    %p80 = por %p78, %p79
    %p82 = scmp.ne.s32.totalorder %s67, %s81
    %p83 = scmp.eq.s32.totalorder %s15, 0
    %p84 = por %p82, %p83
    %s85 = ssub.s32 %s9, %s16
    %p86 = scmp.eq.s32.totalorder %s85, 0
    %s88 = sadd.s32 %s87, 1
    %s89 = scalar_select %p86, %s87, %s88
    %p92 = pneg %p86
    %p93 = scmp.eq.s32.totalorder %s9, 1
    %p94 = por %p92, %p93
    %p95 = scmp.ne.s32.totalorder %s87, %s90
    %p96 = scmp.eq.s32.totalorder %s9, 0
    %p97 = por %p95, %p96
    %p98 = scmp.ne.s32.totalorder %s87, %s90
    %p99 = scmp.eq.s32.totalorder %s14, 1
    %p100 = por %p98, %p99
    %p101 = scmp.ne.s32.totalorder %s90, %s91
    %p102 = scmp.eq.s32.totalorder %s14, 0
    %p103 = por %p101, %p102
    %p104 = scmp.ne.s32.totalorder %s90, %s91
    %p105 = scmp.eq.s32.totalorder %s15, 1
    %p106 = por %p104, %p105
    %p108 = scmp.ne.s32.totalorder %s91, %s107
    %p109 = scmp.eq.s32.totalorder %s15, 0
    %p110 = por %p108, %p109
    %p111 = scmp.le.s32.totalorder 1, %s9
    %p112 = scmp.lt.s32.totalorder %s9, 3
    %p113 = pnand %p111, %p112
    %p114 = pneg %p113
    // Predicated region
    $region9: #{triple_pass.1} parent=5 // pred_check
      _
    $region10: #{triple_pass.1} parent=5 // pred_check_branch
      %116 = sbr.rel (%p113) target = $region12
    $region11: #{triple_pass.1} parent=5 // pred_region
      %s117 = ssub.s32 %s9, 1
      // Predicated region
      $region13: #{triple_pass.1} parent=11 // pred_check
        %p118 = pneg %p56
      $region14: #{triple_pass.1} parent=11 // pred_check_branch
        %120 = sbr.rel (%p118) target = $region16
      $region15: #{triple_pass.1} parent=11 // pred_region
        _
      $region16: #{triple_pass.1} parent=11 // pred_fallthru
        _
      // Predicated region
      $region17: #{triple_pass.1} parent=11 // pred_check
        %p121 = pneg %p77
      $region18: #{triple_pass.1} parent=11 // pred_check_branch
        %123 = sbr.rel (%p121) target = $region20
      $region19: #{triple_pass.1} parent=11 // pred_region
        _
      $region20: #{triple_pass.1} parent=11 // pred_fallthru
        _
    $region12: #{triple_pass.1} parent=5 // pred_fallthru
      _
    %p124 = scmp.lt.s32.totalorder %s9, 2
    // Predicated region
    $region21: #{triple_pass.1} parent=5 // pred_check
      %p125 = pneg %p124
    $region22: #{triple_pass.1} parent=5 // pred_check_branch
      %127 = sbr.rel (%p125) target = $region24
    $region23: #{triple_pass.1} parent=5 // pred_region
      // Predicated region
      $region25: #{triple_pass.1} parent=23 // pred_check
        %p128 = pneg %p29
      $region26: #{triple_pass.1} parent=23 // pred_check_branch
        %130 = sbr.rel (%p128) target = $region28
      $region27: #{triple_pass.1} parent=23 // pred_region
        %p131 = scmp.lt.s32.totalorder %s9, 1
        %s132 = scalar_select %p131, %s9, 1
        %s133 = smul.addr %s132, 2
        %s134 = smul.addr %s133, 4
        %s135 = scalar_lea.vmem %s0, %s134
      $region28: #{triple_pass.1} parent=23 // pred_fallthru
        _
    $region24: #{triple_pass.1} parent=5 // pred_fallthru
      _
    %p136 = scmp.le.s32.totalorder 1, %s9
    %p137 = scmp.lt.s32.totalorder %s9, 3
    %p138 = pnand %p136, %p137
    %p139 = pneg %p138
    // Predicated region
    $region29: #{triple_pass.1} parent=5 // pred_check
      _
    $region30: #{triple_pass.1} parent=5 // pred_check_branch
      %141 = sbr.rel (%p138) target = $region32
    $region31: #{triple_pass.1} parent=5 // pred_region
      %s142 = ssub.s32 %s9, 1
      %p143 = scmp.lt.s32.totalorder %s14, 1
      %s144 = scalar_select %p143, %s14, 1
      %s145 = smul.addr %s144, 2
      %s146 = smul.addr %s145, 4
      %s147 = scalar_lea.vmem %s0, %s146
      %p148 = pneg %p35
      %p149 = pneg %p32
      %p150 = pneg %p56
      %p151 = pneg %p53
      %p152 = pneg %p77
      %p153 = pneg %p74
      %p154 = pneg %p103
      %p155 = pneg %p100
      %p156 = scmp.lt.s32.totalorder %s14, 1
      %s157 = scalar_select %p156, %s14, 1
      %s158 = smul.addr %s157, 2
      %s159 = smul.addr %s158, 4
      %s160 = scalar_lea.vmem %s3, %s159
      %p161 = scmp.lt.s32.totalorder %s14, 1
      %s162 = scalar_select %p161, %s14, 1
      %s163 = smul.addr %s162, 2
      %s164 = smul.addr %s163, 4
      %s165 = scalar_lea.vmem %s0, %s164
      %p166 = scmp.lt.s32.totalorder %s14, 1
      %s167 = scalar_select %p166, %s14, 1
      %s168 = smul.addr %s167, 2
      %s169 = smul.addr %s168, 4
      %s170 = scalar_lea.vmem %s3, %s169
      %v171 = vlaneseq
      %v172 = vand.u32 %v171, 127
      %v173 = vadd.s32 %v172, 128
      %v174 = vand.u32 %v172, 15
      %v175 = vand.u32 %v173, 15
      %v176 = vadd.s32 %v174, 4294967294
      %v177 = vadd.s32 %v175, 4294967294
      %vm178 = vcmp.ge.s32.totalorder %v176, 0
      %vm179 = vcmp.ge.s32.totalorder %v177, 0
      %vm180 = vcmp.lt.s32.totalorder %v176, 16
      %vm181 = vcmp.lt.s32.totalorder %v177, 16
      %vm182 = vmand %vm178, %vm180
      %vm183 = vmand %vm179, %vm181
      %v184 = vsel %vm182, 1.0, 0.0
      %v185 = vsel %vm183, 1.0, 0.0
      %v186 = vadd.s32 %v174, 4294967295
      %v187 = vadd.s32 %v175, 4294967295
      %vm188 = vcmp.ge.s32.totalorder %v186, 0
      %vm189 = vcmp.ge.s32.totalorder %v187, 0
      %vm190 = vcmp.lt.s32.totalorder %v186, 16
      %vm191 = vcmp.lt.s32.totalorder %v187, 16
      %vm192 = vmand %vm188, %vm190
      %vm193 = vmand %vm189, %vm191
      %v194 = vsel %vm192, 1.0, 0.0
      %v195 = vsel %vm193, 1.0, 0.0
      %v196 = vadd.s32 %v174, 1
      %v197 = vadd.s32 %v175, 1
      %vm198 = vcmp.ge.s32.totalorder %v196, 0
      %vm199 = vcmp.ge.s32.totalorder %v197, 0
      %vm200 = vcmp.lt.s32.totalorder %v196, 16
      %vm201 = vcmp.lt.s32.totalorder %v197, 16
      %vm202 = vmand %vm198, %vm200
      %vm203 = vmand %vm199, %vm201
      %v204 = vsel %vm202, 1.0, 0.0
      %v205 = vsel %vm203, 1.0, 0.0
      %v206 = vadd.s32 %v174, 2
      %v207 = vadd.s32 %v175, 2
      %vm208 = vcmp.ge.s32.totalorder %v206, 0
      %vm209 = vcmp.ge.s32.totalorder %v207, 0
      %vm210 = vcmp.lt.s32.totalorder %v206, 16
      %vm211 = vcmp.lt.s32.totalorder %v207, 16
      %vm212 = vmand %vm208, %vm210
      %vm213 = vmand %vm209, %vm211
      %v214 = vsel %vm212, 1.0, 0.0
      %v215 = vsel %vm213, 1.0, 0.0
      %v216 = vld [vmem:[%s165] sm:$0xff]
      %218 = vst [vmem:[#allocation1] ss:$2 sm:$0xff] %v216
      %v219 = vld.sshfl [vmem:[#allocation1] sm:$0xff pattern:$0x75316420]
      %v220 = vld.sshfl [vmem:[#allocation1 + $0x8] sm:$0xff pattern:$0x75316420]
      %221 = vrot.lane.b32.xlu0 %v219, 34
      %v222 = vpop.permute.xlu0 %221
      %223 = vrot.lane.b32.xlu0 %v220, 34
      %v224 = vpop.permute.xlu0 %223
      %vm225 = vcmask 277504
      %v226 = vsel %vm225, %v222, %v224
      %v229 = vsel %vm225, 0.0, %v222
      %v230 = vmul.f32 %v229, %v184
      %v231 = vmul.f32 %v226, %v185
      %v232 = vld [vmem:[%s165] sm:$0xff]
      %234 = vst [vmem:[#allocation1] ss:$2 sm:$0xff] %v232
      %v235 = vld.sshfl [vmem:[#allocation1] sm:$0xff pattern:$0x75316420]
      %v236 = vld.sshfl [vmem:[#allocation1 + $0x8] sm:$0xff pattern:$0x75316420]
      %237 = vrot.lane.b32.xlu0 %v235, 33
      %v238 = vpop.permute.xlu0 %237
      %239 = vrot.lane.b32.xlu0 %v236, 33
      %v240 = vpop.permute.xlu0 %239
      %vm241 = vcmask 269312
      %v242 = vsel %vm241, %v238, %v240
      %v245 = vsel %vm241, 0.0, %v238
      %v246 = vmul.f32 %v245, %v194
      %v247 = vmul.f32 %v242, %v195
      %v248 = vld [vmem:[%s165] sm:$0xff]
      %250 = vst [vmem:[#allocation1] ss:$2 sm:$0xff] %v248
      %v251 = vld.sshfl [vmem:[#allocation1] sm:$0xff pattern:$0x75316420]
      %v252 = vld.sshfl [vmem:[#allocation1 + $0x8] sm:$0xff pattern:$0x75316420]
      %253 = vrot.lane.b32.xlu0 %v251, 32
      %v254 = vpop.permute.xlu0 %253
      %255 = vrot.lane.b32.xlu0 %v252, 32
      %v256 = vpop.permute.xlu0 %255
      %vm257 = vcmask 261120
      %v258 = vsel %vm257, %v254, %v256
      %v261 = vsel %vm257, 0.0, %v254
      %v262 = vld [vmem:[%s165] sm:$0xff]
      %264 = vst [vmem:[#allocation1] ss:$2 sm:$0xff] %v262
      %v265 = vld.sshfl [vmem:[#allocation1] sm:$0xff pattern:$0x75316420]
      %v266 = vld.sshfl [vmem:[#allocation1 + $0x8] sm:$0xff pattern:$0x75316420]
      %267 = vrot.lane.b32.xlu0 %v265, 31
      %v268 = vpop.permute.xlu0 %267
      %269 = vrot.lane.b32.xlu0 %v266, 31
      %v270 = vpop.permute.xlu0 %269
      %vm271 = vcmask 252928
      %v272 = vsel %vm271, %v268, %v270
      %v275 = vsel %vm271, 0.0, %v268
      %v276 = vmul.f32 %v275, %v204
      %v277 = vmul.f32 %v272, %v205
      %v278 = vld [vmem:[%s165] sm:$0xff]
      %280 = vst [vmem:[#allocation1] ss:$2 sm:$0xff] %v278
      %v281 = vld.sshfl [vmem:[#allocation1] sm:$0xff pattern:$0x75316420]
      %v282 = vld.sshfl [vmem:[#allocation1 + $0x8] sm:$0xff pattern:$0x75316420]
      %283 = vrot.lane.b32.xlu0 %v281, 30
      %v284 = vpop.permute.xlu0 %283
      %285 = vrot.lane.b32.xlu0 %v282, 30
      %v286 = vpop.permute.xlu0 %285
      %vm287 = vcmask 244736
      %v288 = vsel %vm287, %v284, %v286
      %v291 = vsel %vm287, 0.0, %v284
      %v292 = vmul.f32 %v291, %v214
      %v293 = vmul.f32 %v288, %v215
      %v294 = vld [vmem:[%s165] sm:$0xff]
      %296 = vst [vmem:[#allocation1] ss:$2 sm:$0xff] %v294
      %v297 = vld.sshfl [vmem:[#allocation1] sm:$0xff pattern:$0x75316420]
      %v298 = vld.sshfl [vmem:[#allocation1 + $0x8] sm:$0xff pattern:$0x75316420]
      %299 = vrot.lane.b32.xlu0 %v297, 18
      %v300 = vpop.permute.xlu0 %299
      %301 = vrot.lane.b32.xlu0 %v298, 18
      %v302 = vpop.permute.xlu0 %301
      %vm303 = vcmask 146432
      %v304 = vsel %vm303, %v300, %v302
      %v307 = vsel %vm303, 0.0, %v300
      %v308 = vmul.f32 %v307, %v184
      %v309 = vmul.f32 %v304, %v185
      %v310 = vld [vmem:[%s165] sm:$0xff]
      %312 = vst [vmem:[#allocation1] ss:$2 sm:$0xff] %v310
      %v313 = vld.sshfl [vmem:[#allocation1] sm:$0xff pattern:$0x75316420]
      %v314 = vld.sshfl [vmem:[#allocation1 + $0x8] sm:$0xff pattern:$0x75316420]
      %315 = vrot.lane.b32.xlu0 %v313, 17
      %v316 = vpop.permute.xlu0 %315
      %317 = vrot.lane.b32.xlu0 %v314, 17
      %v318 = vpop.permute.xlu0 %317
      %vm319 = vcmask 138240
      %v320 = vsel %vm319, %v316, %v318
      %v323 = vsel %vm319, 0.0, %v316
      %v324 = vmul.f32 %v323, %v194
      %v325 = vmul.f32 %v320, %v195
      %v326 = vld [vmem:[%s165] sm:$0xff]
      %328 = vst [vmem:[#allocation1] ss:$2 sm:$0xff] %v326
      %v329 = vld.sshfl [vmem:[#allocation1] sm:$0xff pattern:$0x75316420]
      %v330 = vld.sshfl [vmem:[#allocation1 + $0x8] sm:$0xff pattern:$0x75316420]
      %331 = vrot.lane.b32.xlu0 %v329, 16
      %v332 = vpop.permute.xlu0 %331
      %333 = vrot.lane.b32.xlu0 %v330, 16
      %v334 = vpop.permute.xlu0 %333
      %vm335 = vcmask 130048
      %v336 = vsel %vm335, %v332, %v334
      %v338 = vsel %vm335, 0.0, %v332
      %v339 = vld [vmem:[%s165] sm:$0xff]
      %341 = vst [vmem:[#allocation1] ss:$2 sm:$0xff] %v339
      %v342 = vld.sshfl [vmem:[#allocation1] sm:$0xff pattern:$0x75316420]
      %v343 = vld.sshfl [vmem:[#allocation1 + $0x8] sm:$0xff pattern:$0x75316420]
      %344 = vrot.lane.b32.xlu0 %v342, 15
      %v345 = vpop.permute.xlu0 %344
      %346 = vrot.lane.b32.xlu0 %v343, 15
      %v347 = vpop.permute.xlu0 %346
      %vm348 = vcmask 121856
      %v349 = vsel %vm348, %v345, %v347
      %v352 = vsel %vm348, 0.0, %v345
      %v353 = vmul.f32 %v352, %v204
      %v354 = vmul.f32 %v349, %v205
      %v355 = vld [vmem:[%s165] sm:$0xff]
      %357 = vst [vmem:[#allocation1] ss:$2 sm:$0xff] %v355
      %v358 = vld.sshfl [vmem:[#allocation1] sm:$0xff pattern:$0x75316420]
      %v359 = vld.sshfl [vmem:[#allocation1 + $0x8] sm:$0xff pattern:$0x75316420]
      %360 = vrot.lane.b32.xlu0 %v358, 14
      %v361 = vpop.permute.xlu0 %360
      %362 = vrot.lane.b32.xlu0 %v359, 14
      %v363 = vpop.permute.xlu0 %362
      %vm364 = vcmask 113664
      %v365 = vsel %vm364, %v361, %v363
      %v368 = vsel %vm364, 0.0, %v361
      %v369 = vmul.f32 %v368, %v214
      %v370 = vmul.f32 %v365, %v215
      %v371 = vld [vmem:[%s165] sm:$0xff]
      %373 = vst [vmem:[#allocation1] ss:$2 sm:$0xff] %v371
      %v374 = vld.sshfl [vmem:[#allocation1] sm:$0xff pattern:$0x75316420]
      %v375 = vld.sshfl [vmem:[#allocation1 + $0x8] sm:$0xff pattern:$0x75316420]
      %376 = vrot.lane.b32.xlu0 %v374, 2
      %v377 = vpop.permute.xlu0 %376
      %378 = vrot.lane.b32.xlu0 %v375, 2
      %v379 = vpop.permute.xlu0 %378
      %vm380 = vcmask 15360
      %v381 = vsel %vm380, %v377, %v379
      %v384 = vsel %vm380, 0.0, %v377
      %v385 = vmul.f32 %v384, %v184
      %v386 = vmul.f32 %v381, %v185
      %v387 = vld [vmem:[%s165] sm:$0xff]
      %389 = vst [vmem:[#allocation1] ss:$2 sm:$0xff] %v387
      %v390 = vld.sshfl [vmem:[#allocation1] sm:$0xff pattern:$0x75316420]
      %v391 = vld.sshfl [vmem:[#allocation1 + $0x8] sm:$0xff pattern:$0x75316420]
      %392 = vrot.lane.b32.xlu0 %v390, 1
      %v393 = vpop.permute.xlu0 %392
      %394 = vrot.lane.b32.xlu0 %v391, 1
      %v395 = vpop.permute.xlu0 %394
      %vm396 = vcmask 7168
      %v397 = vsel %vm396, %v393, %v395
      %v400 = vsel %vm396, 0.0, %v393
      %v401 = vmul.f32 %v400, %v194
      %v402 = vmul.f32 %v397, %v195
      %v403 = vld [vmem:[%s165] sm:$0xff]
      %405 = vst [vmem:[#allocation1] ss:$2 sm:$0xff] %v403
      %v406 = vld.sshfl [vmem:[#allocation1] sm:$0xff pattern:$0x75316420]
      %v407 = vld.sshfl [vmem:[#allocation1 + $0x8] sm:$0xff pattern:$0x75316420]
      %408 = vrot.lane.b32.xlu0 %v406, 127
      %v409 = vpop.permute.xlu0 %408
      %410 = vrot.lane.b32.xlu0 %v407, 127
      %v411 = vpop.permute.xlu0 %410
      %vm412 = vcmask 1039360
      %v413 = vsel %vm412, %v409, %v411
      %v416 = vsel %vm412, %v411, 0.0
      %v417 = vmul.f32 %v413, %v204
      %v418 = vmul.f32 %v416, %v205
      %v419 = vld [vmem:[%s165] sm:$0xff]
      %421 = vst [vmem:[#allocation1] ss:$2 sm:$0xff] %v419
      %v422 = vld.sshfl [vmem:[#allocation1] sm:$0xff pattern:$0x75316420]
      %v423 = vld.sshfl [vmem:[#allocation1 + $0x8] sm:$0xff pattern:$0x75316420]
      %424 = vrot.lane.b32.xlu0 %v422, 126
      %v425 = vpop.permute.xlu0 %424
      %426 = vrot.lane.b32.xlu0 %v423, 126
      %v427 = vpop.permute.xlu0 %426
      %vm428 = vcmask 1031168
      %v429 = vsel %vm428, %v425, %v427
      %v432 = vsel %vm428, %v427, 0.0
      %v433 = vmul.f32 %v429, %v214
      %v434 = vmul.f32 %v432, %v215
      %v435 = vld [vmem:[%s165] sm:$0xff]
      %437 = vst [vmem:[#allocation1] ss:$2 sm:$0xff] %v435
      %v438 = vld.sshfl [vmem:[#allocation1] sm:$0xff pattern:$0x75316420]
      %v439 = vld.sshfl [vmem:[#allocation1 + $0x8] sm:$0xff pattern:$0x75316420]
      %440 = vrot.lane.b32.xlu0 %v438, 114
      %v441 = vpop.permute.xlu0 %440
      %442 = vrot.lane.b32.xlu0 %v439, 114
      %v443 = vpop.permute.xlu0 %442
      %vm444 = vcmask 932864
      %v445 = vsel %vm444, %v441, %v443
      %v448 = vsel %vm444, %v443, 0.0
      %v449 = vmul.f32 %v445, %v184
      %v450 = vmul.f32 %v448, %v185
      %v451 = vld [vmem:[%s165] sm:$0xff]
      %453 = vst [vmem:[#allocation1] ss:$2 sm:$0xff] %v451
      %v454 = vld.sshfl [vmem:[#allocation1] sm:$0xff pattern:$0x75316420]
      %v455 = vld.sshfl [vmem:[#allocation1 + $0x8] sm:$0xff pattern:$0x75316420]
      %456 = vrot.lane.b32.xlu0 %v454, 113
      %v457 = vpop.permute.xlu0 %456
      %458 = vrot.lane.b32.xlu0 %v455, 113
      %v459 = vpop.permute.xlu0 %458
      %vm460 = vcmask 924672
      %v461 = vsel %vm460, %v457, %v459
      %v464 = vsel %vm460, %v459, 0.0
      %v465 = vmul.f32 %v461, %v194
      %v466 = vmul.f32 %v464, %v195
      %v467 = vld [vmem:[%s165] sm:$0xff]
      %469 = vst [vmem:[#allocation1] ss:$2 sm:$0xff] %v467
      %v470 = vld.sshfl [vmem:[#allocation1] sm:$0xff pattern:$0x75316420]
      %v471 = vld.sshfl [vmem:[#allocation1 + $0x8] sm:$0xff pattern:$0x75316420]
      %472 = vrot.lane.b32.xlu0 %v470, 112
      %v473 = vpop.permute.xlu0 %472
      %474 = vrot.lane.b32.xlu0 %v471, 112
      %v475 = vpop.permute.xlu0 %474
      %vm476 = vcmask 916480
      %v477 = vsel %vm476, %v473, %v475
      %v479 = vsel %vm476, %v475, 0.0
      %v480 = vld [vmem:[%s165] sm:$0xff]
      %482 = vst [vmem:[#allocation1] ss:$2 sm:$0xff] %v480
      %v483 = vld.sshfl [vmem:[#allocation1] sm:$0xff pattern:$0x75316420]
      %v484 = vld.sshfl [vmem:[#allocation1 + $0x8] sm:$0xff pattern:$0x75316420]
      %485 = vrot.lane.b32.xlu0 %v483, 111
      %v486 = vpop.permute.xlu0 %485
      %487 = vrot.lane.b32.xlu0 %v484, 111
      %v488 = vpop.permute.xlu0 %487
      %vm489 = vcmask 908288
      %v490 = vsel %vm489, %v486, %v488
      %v493 = vsel %vm489, %v488, 0.0
      %v494 = vmul.f32 %v490, %v204
      %v495 = vmul.f32 %v493, %v205
      %v496 = vld [vmem:[%s165] sm:$0xff]
      %498 = vst [vmem:[#allocation1] ss:$2 sm:$0xff] %v496
      %v499 = vld.sshfl [vmem:[#allocation1] sm:$0xff pattern:$0x75316420]
      %v500 = vld.sshfl [vmem:[#allocation1 + $0x8] sm:$0xff pattern:$0x75316420]
      %501 = vrot.lane.b32.xlu0 %v499, 110
      %v502 = vpop.permute.xlu0 %501
      %503 = vrot.lane.b32.xlu0 %v500, 110
      %v504 = vpop.permute.xlu0 %503
      %vm505 = vcmask 900096
      %v506 = vsel %vm505, %v502, %v504
      %v509 = vsel %vm505, %v504, 0.0
      %v510 = vmul.f32 %v506, %v214
      %v511 = vmul.f32 %v509, %v215
      %v512 = vld [vmem:[%s165] sm:$0xff]
      %514 = vst [vmem:[#allocation1] ss:$2 sm:$0xff] %v512
      %v515 = vld.sshfl [vmem:[#allocation1] sm:$0xff pattern:$0x75316420]
      %v516 = vld.sshfl [vmem:[#allocation1 + $0x8] sm:$0xff pattern:$0x75316420]
      %517 = vrot.lane.b32.xlu0 %v515, 98
      %v518 = vpop.permute.xlu0 %517
      %519 = vrot.lane.b32.xlu0 %v516, 98
      %v520 = vpop.permute.xlu0 %519
      %vm521 = vcmask 801792
      %v522 = vsel %vm521, %v518, %v520
      %v525 = vsel %vm521, %v520, 0.0
      %v526 = vmul.f32 %v522, %v184
      %v527 = vmul.f32 %v525, %v185
      %v528 = vld [vmem:[%s165] sm:$0xff]
      %530 = vst [vmem:[#allocation1] ss:$2 sm:$0xff] %v528
      %v531 = vld.sshfl [vmem:[#allocation1] sm:$0xff pattern:$0x75316420]
      %v532 = vld.sshfl [vmem:[#allocation1 + $0x8] sm:$0xff pattern:$0x75316420]
      %533 = vrot.lane.b32.xlu0 %v531, 97
      %v534 = vpop.permute.xlu0 %533
      %535 = vrot.lane.b32.xlu0 %v532, 97
      %v536 = vpop.permute.xlu0 %535
      %vm537 = vcmask 793600
      %v538 = vsel %vm537, %v534, %v536
      %v541 = vsel %vm537, %v536, 0.0
      %v542 = vmul.f32 %v538, %v194
      %v543 = vmul.f32 %v541, %v195
      %v544 = vld [vmem:[%s165] sm:$0xff]
      %546 = vst [vmem:[#allocation1] ss:$2 sm:$0xff] %v544
      %v547 = vld.sshfl [vmem:[#allocation1] sm:$0xff pattern:$0x75316420]
      %v548 = vld.sshfl [vmem:[#allocation1 + $0x8] sm:$0xff pattern:$0x75316420]
      %549 = vrot.lane.b32.xlu0 %v547, 96
      %v550 = vpop.permute.xlu0 %549
      %551 = vrot.lane.b32.xlu0 %v548, 96
      %v552 = vpop.permute.xlu0 %551
      %vm553 = vcmask 785408
      %v554 = vsel %vm553, %v550, %v552
      %v557 = vsel %vm553, %v552, 0.0
      %v558 = vld [vmem:[%s165] sm:$0xff]
      %560 = vst [vmem:[#allocation1] ss:$2 sm:$0xff] %v558
      %v561 = vld.sshfl [vmem:[#allocation1] sm:$0xff pattern:$0x75316420]
      %v562 = vld.sshfl [vmem:[#allocation1 + $0x8] sm:$0xff pattern:$0x75316420]
      %563 = vrot.lane.b32.xlu0 %v561, 95
      %v564 = vpop.permute.xlu0 %563
      %565 = vrot.lane.b32.xlu0 %v562, 95
      %v566 = vpop.permute.xlu0 %565
      %vm567 = vcmask 777216
      %v568 = vsel %vm567, %v564, %v566
      %v571 = vsel %vm567, %v566, 0.0
      %v572 = vmul.f32 %v568, %v204
      %v573 = vmul.f32 %v571, %v205
      %v574 = vld [vmem:[%s165] sm:$0xff]
      %576 = vst [vmem:[#allocation1] ss:$2 sm:$0xff] %v574
      %v577 = vld.sshfl [vmem:[#allocation1] sm:$0xff pattern:$0x75316420]
      %v578 = vld.sshfl [vmem:[#allocation1 + $0x8] sm:$0xff pattern:$0x75316420]
      %579 = vrot.lane.b32.xlu0 %v577, 94
      %v580 = vpop.permute.xlu0 %579
      %581 = vrot.lane.b32.xlu0 %v578, 94
      %v582 = vpop.permute.xlu0 %581
      %vm583 = vcmask 769024
      %v584 = vsel %vm583, %v580, %v582
      %v587 = vsel %vm583, %v582, 0.0
      %v588 = vmul.f32 %v584, %v214
      %v589 = vmul.f32 %v587, %v215
      %v592 = vrot.slane %v246, 4
      %v593 = vrot.slane %v247, 4
      %v598 = vrot.slane %v276, 4
      %v599 = vrot.slane %v277, 4
      %v604 = vrot.slane %v308, 4
      %v605 = vrot.slane %v309, 4
      %v609 = vrot.slane %v338, 4
      %v610 = vrot.slane %v336, 4
      %v615 = vrot.slane %v369, 4
      %v616 = vrot.slane %v370, 4
      %v621 = vrot.slane %v401, 4
      %v622 = vrot.slane %v402, 4
      %625 = vst [vmem:[#allocation1] ss:$2 sm:$0xff] %v216
      %v626 = vld.sshfl [vmem:[#allocation1] sm:$0xff pattern:$0x75316420]
      %v627 = vld.sshfl [vmem:[#allocation1 + $0x8] sm:$0xff pattern:$0x75316420]
      %v632 = vrot.slane %v417, 4
      %v633 = vrot.slane %v418, 4
      %v638 = vrot.slane %v449, 4
      %v639 = vrot.slane %v450, 4
      %vm642 = vcmask 1043456
      %v643 = vsel %vm642, %v230, %v592
      %v644 = vsel %vm642, %v231, %v593
      %v645 = vsel %vm642, %v261, %v598
      %v646 = vsel %vm642, %v258, %v599
      %v647 = vsel %vm642, %v292, %v604
      %v648 = vsel %vm642, %v293, %v605
      %v649 = vsel %vm642, %v324, %v609
      %v650 = vsel %vm642, %v325, %v610
      %v651 = vsel %vm642, %v353, %v615
      %v652 = vsel %vm642, %v354, %v616
      %v653 = vsel %vm642, %v385, %v621
      %v654 = vsel %vm642, %v386, %v622
      %v655 = vsel %vm642, %v626, %v632
      %v656 = vsel %vm642, %v627, %v633
      %v657 = vsel %vm642, %v433, %v638
      %v658 = vsel %vm642, %v434, %v639
      %v660 = vrot.slane %v477, 4
      %v661 = vrot.slane %v479, 4
      %v666 = vrot.slane %v510, 4
      %v667 = vrot.slane %v511, 4
      %v672 = vrot.slane %v542, 4
      %v673 = vrot.slane %v543, 4
      %v678 = vrot.slane %v572, 4
      %v679 = vrot.slane %v573, 4
      %v682 = vsel %vm642, %v465, %v660
      %v683 = vsel %vm642, %v466, %v661
      %v684 = vsel %vm642, %v494, %v666
      %v685 = vsel %vm642, %v495, %v667
      %v686 = vsel %vm642, %v526, %v672
      %v687 = vsel %vm642, %v527, %v673
      %v688 = vsel %vm642, %v554, %v678
      %v689 = vsel %vm642, %v557, %v679
      %v690 = vsel %vm642, %v588, 1.0
      %v691 = vsel %vm642, %v589, 1.0
      %v692 = vld [vmem:[%s1] sm:$0xff]
      %v693 = vld [vmem:[%s1 + $0x8] sm:$0xf]
      %vm694 = vcmask 826368
      %v696 = vsel %vm694, %v692, 0
      %v699 = vsel %vm694, %v693, 0
      %vm701 = vcmask 1044480
      %v703 = vsel %vm701, %v690, 0
      %v706 = vsel %vm701, %v691, 0
      %708 = vmatpush.msra.mxu0 0.0
      %709 = vmatpush.msra.mxu0 0.0
      %710 = vmatpush.msra.mxu0 0.0
      %711 = vmatpush.msra.mxu0 %v703
      %712 = vmatpush.msra.mxu0 %v688
      %713 = vmatpush.msra.mxu0 %v686
      %714 = vmatpush.msra.mxu0 %v684
      %715 = vmatpush.msra.mxu0 %v682
      %716 = vmatpush.msra.mxu0 %v657
      %717 = vmatpush.msra.mxu0 %v655
      %718 = vmatpush.msra.mxu0 %v653
      %719 = vmatpush.msra.mxu0 %v651
      %720 = vmatpush.msra.mxu0 %v649
      %721 = vmatpush.msra.mxu0 %v647
      %722 = vmatpush.msra.mxu0 %v645
      %723 = vmatpush.msra.mxu0 %v643
      %724 = vmatmul.f32.gmra.mxu0 %v696
      %v725 = vpop.f32.mrf.mxu0
      %v726 = vadd.f32 0.0, %v725
      %727 = vmatmul.f32.gmra.mxu0 %v699
      %v728 = vpop.f32.mrf.mxu0
      %v729 = vadd.f32 0.0, %v728
      %730 = vdwg.mxu0
      %731 = vmatpush.msra.mxu0 0.0
      %732 = vmatpush.msra.mxu0 0.0
      %733 = vmatpush.msra.mxu0 0.0
      %734 = vmatpush.msra.mxu0 %v706
      %735 = vmatpush.msra.mxu0 %v689
      %736 = vmatpush.msra.mxu0 %v687
      %737 = vmatpush.msra.mxu0 %v685
      %738 = vmatpush.msra.mxu0 %v683
      %739 = vmatpush.msra.mxu0 %v658
      %740 = vmatpush.msra.mxu0 %v656
      %741 = vmatpush.msra.mxu0 %v654
      %742 = vmatpush.msra.mxu0 %v652
      %743 = vmatpush.msra.mxu0 %v650
      %744 = vmatpush.msra.mxu0 %v648
      %745 = vmatpush.msra.mxu0 %v646
      %746 = vmatpush.msra.mxu0 %v644
      %747 = vmatmul.f32.gmra.mxu0 %v696
      %v748 = vpop.f32.mrf.mxu0
      %v749 = vadd.f32 0.0, %v748
      %750 = vmatmul.f32.gmra.mxu0 %v699
      %v751 = vpop.f32.mrf.mxu0
      %v752 = vadd.f32 0.0, %v751
      %753 = vdwg.mxu0
      %v754 = vmax.f32 %v726, 0.0
      %v755 = vmax.f32 %v749, 0.0
      %v756 = vmax.f32 %v729, 0.0
      %v757 = vmax.f32 %v752, 0.0
      %758 = vst [vmem:[#allocation2] sm:$0xff] %v754
      %759 = vst [vmem:[#allocation2 + $0x8] sm:$0xff] %v755
      %760 = vst [vmem:[#allocation2 + $0x10] sm:$0xf] %v756
      %761 = vst [vmem:[#allocation2 + $0x18] sm:$0xf] %v757
      %v762 = vld [vmem:[#allocation2] sm:$0xff]
      %v763 = vld [vmem:[#allocation2 + $0x8] sm:$0xff]
      %v764 = vld [vmem:[#allocation2 + $0x10] sm:$0xf]
      %v765 = vld [vmem:[#allocation2 + $0x18] sm:$0xf]
      %770 = vrot.lane.b32.xlu0 %v762, 17
      %v771 = vpop.permute.xlu0 %770
      %772 = vrot.lane.b32.xlu0 %v763, 17
      %v773 = vpop.permute.xlu0 %772
      %774 = vrot.lane.b32.xlu0 %v764, 17
      %v775 = vpop.permute.xlu0 %774
      %776 = vrot.lane.b32.xlu0 %v765, 17
      %v777 = vpop.permute.xlu0 %776
      %v778 = vsel %vm319, %v771, %v773
      %v779 = vsel %vm319, %v775, %v777
      %v784 = vsel %vm319, 0.0, %v771
      %v785 = vsel %vm319, 0.0, %v775
      %v786 = vmul.f32 %v784, %v194
      %v787 = vmul.f32 %v778, %v195
      %v788 = vmul.f32 %v785, %v194
      %v789 = vmul.f32 %v779, %v195
      %790 = vrot.lane.b32.xlu0 %v762, 16
      %v791 = vpop.permute.xlu0 %790
      %792 = vrot.lane.b32.xlu0 %v763, 16
      %v793 = vpop.permute.xlu0 %792
      %794 = vrot.lane.b32.xlu0 %v764, 16
      %v795 = vpop.permute.xlu0 %794
      %796 = vrot.lane.b32.xlu0 %v765, 16
      %v797 = vpop.permute.xlu0 %796
      %v798 = vsel %vm335, %v791, %v793
      %v799 = vsel %vm335, %v795, %v797
      %v802 = vsel %vm335, 0.0, %v791
      %v803 = vsel %vm335, 0.0, %v795
      %804 = vrot.lane.b32.xlu0 %v762, 15
      %v805 = vpop.permute.xlu0 %804
      %806 = vrot.lane.b32.xlu0 %v763, 15
      %v807 = vpop.permute.xlu0 %806
      %808 = vrot.lane.b32.xlu0 %v764, 15
      %v809 = vpop.permute.xlu0 %808
      %810 = vrot.lane.b32.xlu0 %v765, 15
      %v811 = vpop.permute.xlu0 %810
      %v812 = vsel %vm348, %v805, %v807
      %v813 = vsel %vm348, %v809, %v811
      %v818 = vsel %vm348, 0.0, %v805
      %v819 = vsel %vm348, 0.0, %v809
      %v820 = vmul.f32 %v818, %v204
      %v821 = vmul.f32 %v812, %v205
      %v822 = vmul.f32 %v819, %v204
      %v823 = vmul.f32 %v813, %v205
      %824 = vrot.lane.b32.xlu0 %v762, 1
      %v825 = vpop.permute.xlu0 %824
      %826 = vrot.lane.b32.xlu0 %v763, 1
      %v827 = vpop.permute.xlu0 %826
      %828 = vrot.lane.b32.xlu0 %v764, 1
      %v829 = vpop.permute.xlu0 %828
      %830 = vrot.lane.b32.xlu0 %v765, 1
      %v831 = vpop.permute.xlu0 %830
      %v832 = vsel %vm396, %v825, %v827
      %v833 = vsel %vm396, %v829, %v831
      %v838 = vsel %vm396, 0.0, %v825
      %v839 = vsel %vm396, 0.0, %v829
      %v840 = vmul.f32 %v838, %v194
      %v841 = vmul.f32 %v832, %v195
      %v842 = vmul.f32 %v839, %v194
      %v843 = vmul.f32 %v833, %v195
      %844 = vrot.lane.b32.xlu0 %v762, 127
      %v845 = vpop.permute.xlu0 %844
      %846 = vrot.lane.b32.xlu0 %v763, 127
      %v847 = vpop.permute.xlu0 %846
      %848 = vrot.lane.b32.xlu0 %v764, 127
      %v849 = vpop.permute.xlu0 %848
      %850 = vrot.lane.b32.xlu0 %v765, 127
      %v851 = vpop.permute.xlu0 %850
      %v852 = vsel %vm412, %v845, %v847
      %v853 = vsel %vm412, %v849, %v851
      %v858 = vsel %vm412, %v847, 0.0
      %v859 = vsel %vm412, %v851, 0.0
      %v860 = vmul.f32 %v852, %v204
      %v861 = vmul.f32 %v858, %v205
      %v862 = vmul.f32 %v853, %v204
      %v863 = vmul.f32 %v859, %v205
      %864 = vrot.lane.b32.xlu0 %v762, 113
      %v865 = vpop.permute.xlu0 %864
      %866 = vrot.lane.b32.xlu0 %v763, 113
      %v867 = vpop.permute.xlu0 %866
      %868 = vrot.lane.b32.xlu0 %v764, 113
      %v869 = vpop.permute.xlu0 %868
      %870 = vrot.lane.b32.xlu0 %v765, 113
      %v871 = vpop.permute.xlu0 %870
      %v872 = vsel %vm460, %v865, %v867
      %v873 = vsel %vm460, %v869, %v871
      %v878 = vsel %vm460, %v867, 0.0
      %v879 = vsel %vm460, %v871, 0.0
      %v880 = vmul.f32 %v872, %v194
      %v881 = vmul.f32 %v878, %v195
      %v882 = vmul.f32 %v873, %v194
      %v883 = vmul.f32 %v879, %v195
      %884 = vrot.lane.b32.xlu0 %v762, 112
      %v885 = vpop.permute.xlu0 %884
      %886 = vrot.lane.b32.xlu0 %v763, 112
      %v887 = vpop.permute.xlu0 %886
      %888 = vrot.lane.b32.xlu0 %v764, 112
      %v889 = vpop.permute.xlu0 %888
      %890 = vrot.lane.b32.xlu0 %v765, 112
      %v891 = vpop.permute.xlu0 %890
      %v892 = vsel %vm476, %v885, %v887
      %v893 = vsel %vm476, %v889, %v891
      %v896 = vsel %vm476, %v887, 0.0
      %v897 = vsel %vm476, %v891, 0.0
      %898 = vrot.lane.b32.xlu0 %v762, 111
      %v899 = vpop.permute.xlu0 %898
      %900 = vrot.lane.b32.xlu0 %v763, 111
      %v901 = vpop.permute.xlu0 %900
      %902 = vrot.lane.b32.xlu0 %v764, 111
      %v903 = vpop.permute.xlu0 %902
      %904 = vrot.lane.b32.xlu0 %v765, 111
      %v905 = vpop.permute.xlu0 %904
      %v906 = vsel %vm489, %v899, %v901
      %v907 = vsel %vm489, %v903, %v905
      %v912 = vsel %vm489, %v901, 0.0
      %v913 = vsel %vm489, %v905, 0.0
      %v914 = vmul.f32 %v906, %v204
      %v915 = vmul.f32 %v912, %v205
      %v916 = vmul.f32 %v907, %v204
      %v917 = vmul.f32 %v913, %v205
      %v920 = vrot.slane %v802, 4
      %v921 = vrot.slane %v798, 4
      %v922 = vrot.slane %v803, 4
      %v923 = vsel %vm642, %v920, %v922
      %v924 = vrot.slane %v799, 4
      %v925 = vsel %vm642, %v921, %v924
      %v934 = vrot.slane %v840, 4
      %v935 = vrot.slane %v841, 4
      %v936 = vrot.slane %v842, 4
      %v937 = vsel %vm642, %v934, %v936
      %v938 = vrot.slane %v843, 4
      %v939 = vsel %vm642, %v935, %v938
      %v948 = vrot.slane %v860, 4
      %v949 = vrot.slane %v861, 4
      %v950 = vrot.slane %v862, 4
      %v951 = vsel %vm642, %v948, %v950
      %v952 = vrot.slane %v863, 4
      %v953 = vsel %vm642, %v949, %v952
      %v960 = vrot.slane %v892, 4
      %v961 = vrot.slane %v896, 4
      %v962 = vrot.slane %v893, 4
      %v963 = vsel %vm642, %v960, %v962
      %v964 = vrot.slane %v897, 4
      %v965 = vsel %vm642, %v961, %v964
      %v970 = vsel %vm642, %v788, %v920
      %v971 = vsel %vm642, %v789, %v921
      %v972 = vsel %vm642, %v822, %v934
      %v973 = vsel %vm642, %v823, %v935
      %v974 = vsel %vm642, %v764, %v948
      %v975 = vsel %vm642, %v765, %v949
      %v976 = vsel %vm642, %v882, %v960
      %v977 = vsel %vm642, %v883, %v961
      %v978 = vsel %vm642, %v916, 1.0
      %v979 = vsel %vm642, %v917, 1.0
      %v980 = vld [vmem:[%s2] sm:$0xf]
      %vm981 = vcmask 891904
      %v983 = vsel %vm981, %v980, 0
      %v986 = vsel %vm701, %v978, 0
      %v989 = vsel %vm701, %v979, 0
      %991 = vmatpush.msra.mxu0 0.0
      %992 = vmatpush.msra.mxu0 0.0
      %993 = vmatpush.msra.mxu0 %v986
      %994 = vmatpush.msra.mxu0 %v914
      %995 = vmatpush.msra.mxu0 %v963
      %996 = vmatpush.msra.mxu0 %v976
      %997 = vmatpush.msra.mxu0 %v880
      %998 = vmatpush.msra.mxu0 %v951
      %999 = vmatpush.msra.mxu0 %v974
      %1000 = vmatpush.msra.mxu0 %v762
      %1001 = vmatpush.msra.mxu0 %v937
      %1002 = vmatpush.msra.mxu0 %v972
      %1003 = vmatpush.msra.mxu0 %v820
      %1004 = vmatpush.msra.mxu0 %v923
      %1005 = vmatpush.msra.mxu0 %v970
      %1006 = vmatpush.msra.mxu0 %v786
      %1007 = vmatmul.f32.gmra.mxu0 %v983
      %v1008 = vpop.f32.mrf.mxu0
      %v1009 = vadd.f32 0.0, %v1008
      %1010 = vdwg.mxu0
      %1011 = vmatpush.msra.mxu0 0.0
      %1012 = vmatpush.msra.mxu0 0.0
      %1013 = vmatpush.msra.mxu0 %v989
      %1014 = vmatpush.msra.mxu0 %v915
      %1015 = vmatpush.msra.mxu0 %v965
      %1016 = vmatpush.msra.mxu0 %v977
      %1017 = vmatpush.msra.mxu0 %v881
      %1018 = vmatpush.msra.mxu0 %v953
      %1019 = vmatpush.msra.mxu0 %v975
      %1020 = vmatpush.msra.mxu0 %v763
      %1021 = vmatpush.msra.mxu0 %v939
      %1022 = vmatpush.msra.mxu0 %v973
      %1023 = vmatpush.msra.mxu0 %v821
      %1024 = vmatpush.msra.mxu0 %v925
      %1025 = vmatpush.msra.mxu0 %v971
      %1026 = vmatpush.msra.mxu0 %v787
      %1027 = vmatmul.f32.gmra.mxu0 %v983
      %v1028 = vpop.f32.mrf.mxu0
      %v1029 = vadd.f32 0.0, %v1028
      %1030 = vdwg.mxu0
      %v1031 = vmax.f32 %v1009, 0.0
      %v1032 = vmax.f32 %v1029, 0.0
      %v1035 = vrot.slane %v1032, 4
      %v1036 = vsel %vm642, %v1031, %v1035
      %v1038 = vadd.f32 %v216, %v1036
      %1039 = vst [vmem:[%s170] sm:$0xff] %v1038
      %p1040 = scmp.lt.s32.totalorder %s14, 1
      %s1041 = scalar_select %p1040, %s14, 1
      %s1042 = smul.addr %s1041, 2
      %s1043 = smul.addr %s1042, 4
      %s1044 = scalar_lea.vmem %s3, %s1043
      // Predicated region
      $region33: #{triple_pass.1} parent=31 // pred_check
        %p1045 = pneg %p100
      $region34: #{triple_pass.1} parent=31 // pred_check_branch
        %1047 = sbr.rel (%p1045) target = $region36
      $region35: #{triple_pass.1} parent=31 // pred_region
        _
      $region36: #{triple_pass.1} parent=31 // pred_fallthru
        _
    $region32: #{triple_pass.1} parent=5 // pred_fallthru
      _
    %p1048 = scmp.le.s32.totalorder 2, %s9
    // Predicated region
    $region37: #{triple_pass.1} parent=5 // pred_check
      %p1049 = pneg %p1048
    $region38: #{triple_pass.1} parent=5 // pred_check_branch
      %1051 = sbr.rel (%p1049) target = $region40
    $region39: #{triple_pass.1} parent=5 // pred_region
      %s1052 = ssub.s32 %s9, 2
      // Predicated region
      $region41: #{triple_pass.1} parent=39 // pred_check
        %p1053 = pneg %p106
      $region42: #{triple_pass.1} parent=39 // pred_check_branch
        %1055 = sbr.rel (%p1053) target = $region44
      $region43: #{triple_pass.1} parent=39 // pred_region
        %p1056 = scmp.lt.s32.totalorder %s15, 1
        %s1057 = scalar_select %p1056, %s15, 1
        %s1058 = smul.addr %s1057, 2
        %s1059 = smul.addr %s1058, 4
        %s1060 = scalar_lea.vmem %s3, %s1059
      $region44: #{triple_pass.1} parent=39 // pred_fallthru
        _
    $region40: #{triple_pass.1} parent=5 // pred_fallthru
      _
  $region6: #{triple_pass.1} parent=0 // loop_footer
    %s13 = sadd.s32 1, %s9
  $region7: #{triple_pass.1} parent=0 // loop_footer_branch
    %8 = sbr.rel target = $region3
  $region8: #{triple_pass.1} parent=0 // loop_exit
    _

</llo_original>
